<compile_context>
chip_gen: v7x
topology: tpu7x:2x2x1
jax: 0.10.0
libtpu: 0.0.40
codegen_flags: <defaults>
</compile_context>

<pallas_src>
import numpy as np
import jax
import jax.numpy as jnp
from jax.experimental import pallas as pl
from jax.experimental.pallas import tpu as pltpu


def _round_up(n, m):
    return ((n + m - 1) // m) * m


# -----------------------------------------------------------------------------
# Kernel: one (TB, TN) output tile per grid step.
# -----------------------------------------------------------------------------
def gated_linear_kernel(t_ref, x_ref, w_ref, vecs_ref, o_ref):
    t = t_ref[...]                        # (TB, 1)       f32
    x = x_ref[...]                        # (TB, dim_in)  f32

    b_lin  = vecs_ref[0:1, :]             # (1, TN)
    w_gate = vecs_ref[1:2, :]             # (1, TN)
    b_gate = vecs_ref[2:3, :]             # (1, TN)
    w_bias = vecs_ref[3:4, :]             # (1, TN)

    # MXU: the only real matmul (K = dim_in), f32 accumulate.
    lin = jnp.dot(x, w_ref[...], preferred_element_type=jnp.float32) + b_lin

    # Hoist the cross-lane broadcast of t once; reuse for gate and bias terms.
    t_b = jnp.broadcast_to(t, lin.shape)   # (TB, TN)

    # gate(t), bias(t) are rank-1 in t -> pure VPU broadcasts (no K=1 matmul).
    z = t_b * w_gate + b_gate
    # sigmoid(z) = 0.5*(tanh(z/2)+1): single EUP tanh, no f32 divide on VALU.
    gate = 0.5 * (jnp.tanh(0.5 * z) + 1.0)

    o_ref[...] = lin * gate + t_b * w_bias


# -----------------------------------------------------------------------------
# Tile selection: derive (tb, tn) from shapes and a per-generation-safe VMEM
# budget (40 MiB fits v7x's 64 MiB/TC with headroom; v5e/v6e have >= 128 MiB).
# -----------------------------------------------------------------------------
def _choose_tiles(B, dim_in, dim_out, *, max_tb=1024, vmem_budget=40 << 20):
    w_bytes = dim_in * dim_out * 4
    # Whole weight resident when modest; else stream 512-wide column panels
    # (multiple of 256 -> full MXU width on v6e/v7x, multiple of 128 for v5e).
    if dim_out <= 512 or w_bytes <= vmem_budget // 2:
        tn = dim_out
    else:
        tn = 512
    w_bufs = 1 if tn == dim_out else 2      # resident weights: single buffer

    fixed = w_bufs * (dim_in + 4) * tn * 4          # W panel + packed vectors
    per_row = 2 * (dim_in + 1 + tn) * 4             # double-buffered t/x/out
    avail = max(vmem_budget - fixed, per_row * 8)
    tb_cap = max(8, (avail // per_row) // 8 * 8)

    tb = min(max_tb, _round_up(B, 8), tb_cap)
    # Keep >= 2 batch blocks when B allows so the "parallel" batch axis can
    # shard across the two TensorCores on v7x (cheap no-op on v5e/v6e).
    if B >= 16:
        tb = min(tb, _round_up(-(-B // 2), 8))
    tb = max(8, (tb // 8) * 8)
    return tb, tn, w_bufs


# -----------------------------------------------------------------------------
# Wrapper: batch x dim_out tiled pallas_call (no host-side padding).
# -----------------------------------------------------------------------------
def gated_linear_forward(t, x, params, *, max_tile_b=1024, vmem_budget=40 << 20):
    B, dim_in = x.shape
    dim_out = params["w_lin"].shape[1]

    # Pack the four (1, dim_out) row-parameters into one array (fewer refs/DMAs).
    vecs = jnp.concatenate(
        [params["b_lin"], params["w_gate"], params["b_gate"], params["w_bias"]],
        axis=0)                                               # (4, dim_out)

    tb, tn, w_bufs = _choose_tiles(B, dim_in, dim_out,
                                   max_tb=max_tile_b, vmem_budget=vmem_budget)
    nb = pl.cdiv(B, tb)
    nn = pl.cdiv(dim_out, tn)
    grid = (nb, nn)

    # Single-buffer the weight-like inputs when their block never changes.
    resident = {"pipeline_mode": pl.Buffered(1)} if nn == 1 else {}

    in_specs = [
        pl.BlockSpec((tb, 1), lambda i, j: (i, 0)),                   # t
        pl.BlockSpec((tb, dim_in), lambda i, j: (i, 0)),              # x
        pl.BlockSpec((dim_in, tn), lambda i, j: (0, j), **resident),  # W_lin
        pl.BlockSpec((4, tn), lambda i, j: (0, j), **resident),       # vectors
    ]
    out_specs = pl.BlockSpec((tb, tn), lambda i, j: (i, j))

    # Scoped-VMEM limit from the actual footprint (+ headroom), floored at
    # 32 MiB (above v5e's 16 MiB default) and capped for v7x safety.
    vmem_bytes = (2 * tb * (dim_in + 1 + tn) * 4
                  + w_bufs * (dim_in + 4) * tn * 4)
    vmem_limit = int(min(96 << 20, max(32 << 20, vmem_bytes + (8 << 20))))

    flops = 2 * B * dim_in * dim_out + 8 * B * dim_out
    bytes_accessed = 4 * (B * (dim_in + 1 + dim_out)
                          + nb * (dim_in + 4) * dim_out)

    out = pl.pallas_call(
        gated_linear_kernel,
        out_shape=jax.ShapeDtypeStruct((B, dim_out), jnp.float32),
        grid=grid,
        in_specs=in_specs,
        out_specs=out_specs,
        compiler_params=pltpu.CompilerParams(
            dimension_semantics=("parallel", "parallel"),
            vmem_limit_bytes=vmem_limit),
        cost_estimate=pl.CostEstimate(
            flops=flops,
            transcendentals=B * dim_out,
            bytes_accessed=bytes_accessed),
    )(t, x, params["w_lin"], vecs)

    return out


# -----------------------------------------------------------------------------
# Pure-JAX reference (mirrors the PyTorch forward exactly).
# -----------------------------------------------------------------------------
def gated_linear_reference(t, x, p):
    gate = jax.nn.sigmoid(t @ p["w_gate"] + p["b_gate"])
    return (x @ p["w_lin"] + p["b_lin"]) * gate + t @ p["w_bias"]


# -----------------------------------------------------------------------------
if __name__ == "__main__":
    dim_in, dim_out, batch = 16, 8, 12   # batch % 8 != 0: exercises ragged block

    key = jax.random.PRNGKey(0)
    ks = jax.random.split(key, 7)

    # Weights stored as (in_features, out_features): x @ W == torch x @ W.T.
    p = {
        "w_lin":  jax.random.normal(ks[0], (dim_in, dim_out), jnp.float32)
                  * (1.0 / np.sqrt(dim_in)),
        "b_lin":  jax.random.normal(ks[1], (1, dim_out), jnp.float32) * 0.1,
        "w_gate": jax.random.normal(ks[2], (1, dim_out), jnp.float32),
        "b_gate": jax.random.normal(ks[3], (1, dim_out), jnp.float32) * 0.1,
        "w_bias": jax.random.normal(ks[4], (1, dim_out), jnp.float32),
    }

    t = jax.random.normal(ks[5], (batch, 1), jnp.float32)
    x = jax.random.normal(ks[6], (batch, dim_in), jnp.float32)

    y = jax.block_until_ready(gated_linear_forward(t, x, p))
    y_ref = jax.block_until_ready(gated_linear_reference(t, x, p))

    assert y.shape == (batch, dim_out), y.shape
    assert np.allclose(np.asarray(y), np.asarray(y_ref), rtol=1e-5, atol=1e-5), (
        np.max(np.abs(np.asarray(y) - np.asarray(y_ref))))
    print("KERNEL_OK")
</pallas_src>

<mosaic_0001>
module attributes {stable_mosaic.version = 11 : i64} {
  func.func @gated_linear_kernel(%arg0: i32, %arg1: i32, %arg2: memref<16x1xf32, #tpu.memory_space<vmem>>, %arg3: memref<16x16xf32, #tpu.memory_space<vmem>>, %arg4: memref<16x8xf32, #tpu.memory_space<vmem>>, %arg5: memref<4x8xf32, #tpu.memory_space<vmem>>, %arg6: memref<16x8xf32, #tpu.memory_space<vmem>>) attributes {dimension_semantics = [#tpu.dimension_semantics<parallel>, #tpu.dimension_semantics<parallel>], iteration_bounds = array<i64: 1, 1>, scalar_prefetch = 0 : i64, scratch_operands = 0 : i64, tpu.core_type = #tpu.core_type<tc>, window_params = [{transform_indices = @transform_0, window_bounds = array<i64: 16, 1>}, {transform_indices = @transform_1, window_bounds = array<i64: 16, 16>}, {pipeline_mode = #tpu.pipeline_mode<synchronous>, transform_indices = @transform_2, window_bounds = array<i64: 16, 8>}, {pipeline_mode = #tpu.pipeline_mode<synchronous>, transform_indices = @transform_3, window_bounds = array<i64: 4, 8>}, {transform_indices = @transform_4, window_bounds = array<i64: 16, 8>}]} {
    %c0 = arith.constant 0 : index
    %c0_0 = arith.constant 0 : index
    %0 = vector.load %arg2[%c0, %c0_0] : memref<16x1xf32, #tpu.memory_space<vmem>>, vector<16x1xf32>
    %c0_1 = arith.constant 0 : index
    %c0_2 = arith.constant 0 : index
    %1 = vector.load %arg3[%c0_1, %c0_2] : memref<16x16xf32, #tpu.memory_space<vmem>>, vector<16x16xf32>
    %c0_3 = arith.constant 0 : index
    %c0_4 = arith.constant 0 : index
    %2 = vector.load %arg5[%c0_3, %c0_4] : memref<4x8xf32, #tpu.memory_space<vmem>>, vector<1x8xf32>
    %c1 = arith.constant 1 : index
    %c0_5 = arith.constant 0 : index
    %3 = vector.load %arg5[%c1, %c0_5] : memref<4x8xf32, #tpu.memory_space<vmem>>, vector<1x8xf32>
    %c2 = arith.constant 2 : index
    %c0_6 = arith.constant 0 : index
    %4 = vector.load %arg5[%c2, %c0_6] : memref<4x8xf32, #tpu.memory_space<vmem>>, vector<1x8xf32>
    %c3 = arith.constant 3 : index
    %c0_7 = arith.constant 0 : index
    %5 = vector.load %arg5[%c3, %c0_7] : memref<4x8xf32, #tpu.memory_space<vmem>>, vector<1x8xf32>
    %c0_8 = arith.constant 0 : index
    %c0_9 = arith.constant 0 : index
    %6 = vector.load %arg4[%c0_8, %c0_9] : memref<16x8xf32, #tpu.memory_space<vmem>>, vector<16x8xf32>
    %cst = arith.constant dense<0.000000e+00> : vector<16x8xf32>
    %7 = tpu.matmul %1, %6, %cst {dimension_numbers = #tpu.dot_dimension_numbers<[1], [0], [0], [1], [0, 0, 1, 1], [], []>} : vector<16x16xf32>, vector<16x8xf32>, vector<16x8xf32> -> vector<16x8xf32>
    %8 = vector.broadcast %2 : vector<1x8xf32> to vector<16x8xf32>
    %9 = arith.addf %7, %8 : vector<16x8xf32>
    %10 = vector.shape_cast %0 : vector<16x1xf32> to vector<16x1xf32>
    %11 = vector.broadcast %10 : vector<16x1xf32> to vector<16x8xf32>
    %12 = vector.broadcast %3 : vector<1x8xf32> to vector<16x8xf32>
    %13 = arith.mulf %11, %12 : vector<16x8xf32>
    %14 = vector.broadcast %4 : vector<1x8xf32> to vector<16x8xf32>
    %15 = arith.addf %13, %14 : vector<16x8xf32>
    %cst_10 = arith.constant 5.000000e-01 : f32
    %16 = vector.broadcast %cst_10 : f32 to vector<16x8xf32>
    %17 = arith.mulf %16, %15 : vector<16x8xf32>
    %18 = math.tanh %17 : vector<16x8xf32>
    %cst_11 = arith.constant 1.000000e+00 : f32
    %19 = vector.broadcast %cst_11 : f32 to vector<16x8xf32>
    %20 = arith.addf %18, %19 : vector<16x8xf32>
    %cst_12 = arith.constant 5.000000e-01 : f32
    %21 = vector.broadcast %cst_12 : f32 to vector<16x8xf32>
    %22 = arith.mulf %21, %20 : vector<16x8xf32>
    %23 = arith.mulf %9, %22 : vector<16x8xf32>
    %24 = vector.broadcast %5 : vector<1x8xf32> to vector<16x8xf32>
    %25 = arith.mulf %11, %24 : vector<16x8xf32>
    %26 = arith.addf %23, %25 : vector<16x8xf32>
    %c0_13 = arith.constant 0 : index
    %c0_14 = arith.constant 0 : index
    %27 = vector.load %arg6[%c0_13, %c0_14] : memref<16x8xf32, #tpu.memory_space<vmem>>, vector<16x8xf32>
    tpu.vector_store %arg6[%c0_13, %c0_14], %26 {strides = array<i32>} : memref<16x8xf32, #tpu.memory_space<vmem>>, vector<16x8xf32>,
    return
  }
  func.func @transform_0(%arg0: i32, %arg1: i32) -> (i32, i32) {
    %c0_i32 = arith.constant 0 : i32
    %c0_i32_0 = arith.constant 0 : i32
    return %arg0, %c0_i32 : i32, i32
  }
  func.func @transform_1(%arg0: i32, %arg1: i32) -> (i32, i32) {
    %c0_i32 = arith.constant 0 : i32
    %c0_i32_0 = arith.constant 0 : i32
    return %arg0, %c0_i32 : i32, i32
  }
  func.func @transform_2(%arg0: i32, %arg1: i32) -> (i32, i32) {
    %c0_i32 = arith.constant 0 : i32
    %c0_i32_0 = arith.constant 0 : i32
    return %c0_i32, %arg1 : i32, i32
  }
  func.func @transform_3(%arg0: i32, %arg1: i32) -> (i32, i32) {
    %c0_i32 = arith.constant 0 : i32
    %c0_i32_0 = arith.constant 0 : i32
    return %c0_i32, %arg1 : i32, i32
  }
  func.func @transform_4(%arg0: i32, %arg1: i32) -> (i32, i32) {
    %c0_i32 = arith.constant 0 : i32
    return %arg0, %arg1 : i32, i32
  }
}

</mosaic_0001>

<llo_original>
// kernel: tpu_custom_call.1
$region0: #{tpu_custom_call.1}
  #allocation0 [shape = 'u32[]', space=smem, size = 0x4, offset = 0x4, fixed_abs, tag = 'smem constant byte address 0x4 - core index']
  #allocation1 [shape = 'u32[144,128]{1,0:T(1,128)}', space=vmem, size = 0x12000, scoped, tag = 'internal scratch']
  %s0 = inlined_call_operand.vmem [shape: f32[12,1], index: 0, kind: input, shape index: {}]
  %s1 = inlined_call_operand.vmem [shape: f32[12,16], index: 1, kind: input, shape index: {}]
  %s2 = inlined_call_operand.vmem [shape: f32[16,8], index: 2, kind: input, shape index: {}]
  %s3 = inlined_call_operand.vmem [shape: f32[4,8], index: 3, kind: input, shape index: {}]
  %s4 = inlined_call_operand.vmem [shape: f32[12,8], index: 4, kind: output, shape index: {}]
  %s5 = sld [smem:[#allocation0]]
  $region26: #{tpu_custom_call.1} parent=0
    _
  %s7 = ssub.s32 1, %s5
  %s8 = scalar_select 0, %s7, %s5
  // Predicated region
  $region2: #{tpu_custom_call.1} parent=0 // pred_check
    _
  $region3: #{tpu_custom_call.1} parent=0 // pred_check_branch
    %10 = sbr.rel (0) target = $region5
  $region4: #{tpu_custom_call.1} parent=0 // pred_region
    _
  $region5: #{tpu_custom_call.1} parent=0 // pred_fallthru
    _
  // Predicated region
  $region6: #{tpu_custom_call.1} parent=0 // pred_check
    _
  $region7: #{tpu_custom_call.1} parent=0 // pred_check_branch
    %12 = sbr.rel (0) target = $region9
  $region8: #{tpu_custom_call.1} parent=0 // pred_region
    _
  $region9: #{tpu_custom_call.1} parent=0 // pred_fallthru
    _
  // Predicated region
  $region10: #{tpu_custom_call.1} parent=0 // pred_check
    _
  $region11: #{tpu_custom_call.1} parent=0 // pred_check_branch
    %14 = sbr.rel (0) target = $region13
  $region12: #{tpu_custom_call.1} parent=0 // pred_region
    _
  $region13: #{tpu_custom_call.1} parent=0 // pred_fallthru
    _
  // Predicated region
  $region14: #{tpu_custom_call.1} parent=0 // pred_check
    _
  $region15: #{tpu_custom_call.1} parent=0 // pred_check_branch
    %16 = sbr.rel (0) target = $region17
  $region16: #{tpu_custom_call.1} parent=0 // pred_region
    _
  $region17: #{tpu_custom_call.1} parent=0 // pred_fallthru
    _
  %v17 = vld [vmem:[%s0] sm:$0xff]
  %v18 = vld [vmem:[%s0 + $0x8] sm:$0xff]
  %v19 = vld [vmem:[%s1] sm:$0xff]
  %v20 = vld [vmem:[%s1 + $0x8] sm:$0xff]
  %v21 = vld [vmem:[%s3] sm:$0x1]
  %v22 = vld [vmem:[%s3 + $0x1] sm:$0x1]
  %v23 = vld [vmem:[%s3 + $0x2] sm:$0x1]
  %v24 = vld [vmem:[%s3 + $0x3] sm:$0x1]
  %v25 = vld [vmem:[%s2] sm:$0xff]
  %v26 = vld [vmem:[%s2 + $0x8] sm:$0xff]
  %v27 = vlaneseq
  %v28 = vshrl.u32 %v27, 7
  %v29 = vsub.s32 0, %v28
  %v30 = vrot.slane %v21, %v29
  %vm31 = vcmask 130048
  %v33 = vsel %vm31, %v19, 0
  %v36 = vsel %vm31, %v20, 0
  %38 = vmatprep.subr.mxu0 0.0
  %39 = vmatpush1.msra.mxu0 %v25
  %40 = vmatprep.subr.mxu0 0.0
  %41 = vmatpush1.msra.mxu0 %v26
  %42 = vmatprep.subr.mxu0 0.0
  %43 = vmatpush1.msra.mxu0 0.0
  %44 = vmatprep.subr.mxu0 0.0
  %45 = vmatpush1.msra.mxu0 0.0
  %46 = vmatprep.subr.mxu0 0.0
  %47 = vmatpush1.msra.mxu0 0.0
  %48 = vmatprep.subr.mxu0 0.0
  %49 = vmatpush1.msra.mxu0 0.0
  %50 = vmatprep.subr.mxu0 0.0
  %51 = vmatpush1.msra.mxu0 0.0
  %52 = vmatprep.subr.mxu0 0.0
  %53 = vmatpush1.msra.mxu0 0.0
  %54 = vmatprep.subr.mxu0 0.0
  %55 = vmatpush1.msra.mxu0 0.0
  %56 = vmatprep.subr.mxu0 0.0
  %57 = vmatpush1.msra.mxu0 0.0
  %58 = vmatprep.subr.mxu0 0.0
  %59 = vmatpush1.msra.mxu0 0.0
  %60 = vmatprep.subr.mxu0 0.0
  %61 = vmatpush1.msra.mxu0 0.0
  %62 = vmatprep.subr.mxu0 0.0
  %63 = vmatpush1.msra.mxu0 0.0
  %64 = vmatprep.subr.mxu0 0.0
  %65 = vmatpush1.msra.mxu0 0.0
  %66 = vmatprep.subr.mxu0 0.0
  %67 = vmatpush1.msra.mxu0 0.0
  %68 = vmatprep.subr.mxu0 0.0
  %69 = vmatpush1.msra.mxu0 0.0
  %70 = vmatprep.subr.mxu0 0.0
  %71 = vmatpush1.msra.mxu0 0.0
  %72 = vmatprep.subr.mxu0 0.0
  %73 = vmatpush1.msra.mxu0 0.0
  %74 = vmatprep.subr.mxu0 0.0
  %75 = vmatpush1.msra.mxu0 0.0
  %76 = vmatprep.subr.mxu0 0.0
  %77 = vmatpush1.msra.mxu0 0.0
  %78 = vmatprep.subr.mxu0 0.0
  %79 = vmatpush1.msra.mxu0 0.0
  %80 = vmatprep.subr.mxu0 0.0
  %81 = vmatpush1.msra.mxu0 0.0
  %82 = vmatprep.subr.mxu0 0.0
  %83 = vmatpush1.msra.mxu0 0.0
  %84 = vmatprep.subr.mxu0 0.0
  %85 = vmatpush1.msra.mxu0 0.0
  %86 = vmatprep.subr.mxu0 0.0
  %87 = vmatpush1.msra.mxu0 0.0
  %88 = vmatprep.subr.mxu0 0.0
  %89 = vmatpush1.msra.mxu0 0.0
  %90 = vmatprep.subr.mxu0 0.0
  %91 = vmatpush1.msra.mxu0 0.0
  %92 = vmatprep.subr.mxu0 0.0
  %93 = vmatpush1.msra.mxu0 0.0
  %94 = vmatprep.subr.mxu0 0.0
  %95 = vmatpush1.msra.mxu0 0.0
  %96 = vmatprep.subr.mxu0 0.0
  %97 = vmatpush1.msra.mxu0 0.0
  %98 = vmatprep.subr.mxu0 0.0
  %99 = vmatpush1.msra.mxu0 0.0
  %100 = vmatprep.subr.mxu0 0.0
  %101 = vmatpush1.msra.mxu0 0.0
  %102 = vmatprep.mubr.f32.mxu0 0.0
  %103 = vmatmul.mubr.f32.gmra.mrb[0].mxu0 %v33
  %v104 = vpop.f32.mrb[0].mxu0
  %v105 = vadd.f32 %v30, %v104
  %v106 = vpop.f32.mrb[0].mxu0
  %107 = vmatprep.mubr.f32.mxu0 0.0
  %108 = vmatmul.mubr.f32.gmra.mrb[0].mxu0 %v36
  %v109 = vpop.f32.mrb[0].mxu0
  %v110 = vadd.f32 %v30, %v109
  %v111 = vpop.f32.mrb[0].mxu0
  %112 = vdwg.mxu0
  %114 = vset.pattern.permute.xlu0 0
  %115 = vperm.xlu0 %114, %v17
  %v116 = vpop.permute.xlu0 %115
  %119 = vset.pattern.permute.xlu0 0
  %120 = vperm.xlu0 %119, %v18
  %v121 = vpop.permute.xlu0 %120
  %v123 = vlaneseq
  %v124 = vshrl.u32 %v123, 7
  %v125 = vsub.s32 0, %v124
  %v126 = vrot.slane %v22, %v125
  %v127 = vmul.f32 %v116, %v126
  %v128 = vmul.f32 %v121, %v126
  %v129 = vlaneseq
  %v130 = vshrl.u32 %v129, 7
  %v131 = vsub.s32 0, %v130
  %v132 = vrot.slane %v23, %v131
  %v133 = vadd.f32 %v127, %v132
  %v134 = vadd.f32 %v128, %v132
  %v135 = vmul.f32 %v133, 0.5
  %v136 = vmul.f32 %v134, 0.5
  %v137 = vtanh.pop %v135
  %v138 = vtanh.pop %v136
  %v139 = vadd.f32 %v137, 1.0
  %v140 = vadd.f32 %v138, 1.0
  %v141 = vmul.f32 %v139, 0.5
  %v142 = vmul.f32 %v140, 0.5
  %v143 = vmul.f32 %v105, %v141
  %v144 = vmul.f32 %v110, %v142
  %v145 = vlaneseq
  %v146 = vshrl.u32 %v145, 7
  %v147 = vsub.s32 0, %v146
  %v148 = vrot.slane %v24, %v147
  %v149 = vmul.f32 %v116, %v148
  %v150 = vmul.f32 %v121, %v148
  %v151 = vadd.f32 %v143, %v149
  %v152 = vadd.f32 %v144, %v150
  %vm153 = vcmask 64512
  %154 = vst.msk [vmem:[%s4] sm:$0xff] %vm153, %v151
  %155 = vst.msk [vmem:[%s4 + $0x8] sm:$0xff] %vm153, %v152
  // Predicated region
  $region18: #{tpu_custom_call.1} parent=0 // pred_check
    _
  $region19: #{tpu_custom_call.1} parent=0 // pred_check_branch
    %157 = sbr.rel (0) target = $region21
  $region20: #{tpu_custom_call.1} parent=0 // pred_region
    _
  $region21: #{tpu_custom_call.1} parent=0 // pred_fallthru
    _
  // Predicated region
  $region22: #{tpu_custom_call.1} parent=0 // pred_check
    _
  $region23: #{tpu_custom_call.1} parent=0 // pred_check_branch
    %159 = sbr.rel (0) target = $region25
  $region24: #{tpu_custom_call.1} parent=0 // pred_region
    _
  $region25: #{tpu_custom_call.1} parent=0 // pred_fallthru
    _

</llo_original>
